<compile_context>
chip_gen: v6e
topology: v6e:2x2x1
jax: 0.10.0
libtpu: 0.0.40
codegen_flags: <defaults>
</compile_context>

<pallas_src>
import functools

import jax
import jax.numpy as jnp
from jax.experimental import pallas as pl
from jax.experimental.pallas import tpu as pltpu

HIDDEN = 256


def _critic_kernel(state_ref, option_ref, w1s_ref, w1o_ref, w25_ref, w36_ref,
                   bias_ref, q_ref):
    """Whole twin-head MLP on one batch tile. f32 layer 1, bf16 layers 2-3,
    f32 MXU accumulation throughout, lane-dense (128-wide) output."""
    H = w25_ref.shape[-1]            # 256
    OUT = w36_ref.shape[-1]          # 128 (lane-padded 2 * action_cardinality)

    # Layer 1 (f32, K = S + O <= 32): both heads fused along N ([tm, 2H]),
    # K split over (state, option) so the inputs are never concatenated.
    h = (jnp.dot(state_ref[...], w1s_ref[...], preferred_element_type=jnp.float32)
         + jnp.dot(option_ref[...], w1o_ref[...], preferred_element_type=jnp.float32)
         + bias_ref[:, 0:2 * H])
    h = jnp.maximum(h, 0.0).astype(jnp.bfloat16)             # [tm, 2H]

    # Layer 2: one 256x256 bf16 matmul per head (stacked weights, static index).
    g1 = (jnp.dot(h[:, :H], w25_ref[0], preferred_element_type=jnp.float32)
          + bias_ref[:, 2 * H:3 * H])
    g2 = (jnp.dot(h[:, H:], w25_ref[1], preferred_element_type=jnp.float32)
          + bias_ref[:, 3 * H:4 * H])

    # Layer 3: K-split against the block-diagonal fused weight (no [tm, 2H]
    # concat buffer). Both row slices of w36 are 256-aligned; output is a
    # lane-dense [tm, 128] slab holding [q1 | q2 | zeros].
    q = (jnp.dot(jnp.maximum(g1, 0.0).astype(jnp.bfloat16), w36_ref[:H, :],
                 preferred_element_type=jnp.float32)
         + jnp.dot(jnp.maximum(g2, 0.0).astype(jnp.bfloat16), w36_ref[H:, :],
                   preferred_element_type=jnp.float32)
         + bias_ref[:, 4 * H:4 * H + OUT])
    q_ref[...] = q.astype(q_ref.dtype)


def pack_params(params, state_dim):
    """One-time repack of f32 per-layer params into the kernel's fused layout."""
    H = params["w2"].shape[0]
    A = params["w3"].shape[1]
    OUT = max(128, ((2 * A + 127) // 128) * 128)      # lane-pad layer-3 width

    w1f = jnp.concatenate([params["w1"], params["w4"]], axis=1)       # [S+O, 2H]

    w36 = jnp.zeros((2 * H, OUT), jnp.float32)
    w36 = w36.at[:H, :A].set(params["w3"]).at[H:, A:2 * A].set(params["w6"])

    b36 = jnp.zeros((1, OUT), jnp.float32)
    b36 = b36.at[:, :A].set(params["b3"]).at[:, A:2 * A].set(params["b6"])
    bias = jnp.concatenate(
        [params["b1"], params["b4"], params["b2"], params["b5"], b36],
        axis=1).astype(jnp.float32)                                   # [1, 4H + OUT]

    return {
        "w1s": w1f[:state_dim].astype(jnp.float32),                   # [S, 2H]  f32 (layer 1 stays f32)
        "w1o": w1f[state_dim:].astype(jnp.float32),                   # [O, 2H]  f32
        "w25": jnp.stack([params["w2"], params["w5"]]).astype(jnp.bfloat16),  # [2, H, H]
        "w36": w36.astype(jnp.bfloat16),                              # [2H, OUT] block-diag, lane-padded
        "bias": bias,                                                 # [1, 4H + OUT] f32, 128-aligned
    }


@functools.partial(jax.jit, static_argnames=("action_cardinality", "tm"))
def critic_discrete_forward(state, option, packed, action_cardinality, tm=None):
    """Equivalent of Critic_discrete.forward(state, option) -> (q1, q2)."""
    B, S = state.shape
    O = option.shape[1]
    w1s, w1o, w25, w36, bias = (packed["w1s"], packed["w1o"], packed["w25"],
                                packed["w36"], packed["bias"])
    H = w25.shape[-1]
    OUT = w36.shape[-1]
    A = action_cardinality

    if tm is None:
        if B <= 256:
            tm = B                                   # single tile at small B
        else:
            # >= 2 tiles so both v7x TensorCores engage; tile capped at 1024 rows.
            n_tiles = max(2, -(-B // 1024))
            tm = -(-B // n_tiles)
            tm = ((tm + 7) // 8) * 8                 # sublane-align
    pad = (-B) % tm
    if pad:
        # TODO(synk): for very large ragged batches, switch to a cdiv grid with a
        # masked last tile to avoid this full-batch HBM pad copy.
        state = jnp.pad(state, ((0, pad), (0, 0)))
        option = jnp.pad(option, ((0, pad), (0, 0)))
    bp = B + pad

    q = pl.pallas_call(
        _critic_kernel,
        out_shape=jax.ShapeDtypeStruct((bp, OUT), jnp.float32),
        grid=(bp // tm,),
        in_specs=[
            pl.BlockSpec((tm, S), lambda i: (i, 0)),             # state tile
            pl.BlockSpec((tm, O), lambda i: (i, 0)),             # option tile
            pl.BlockSpec((S, 2 * H), lambda i: (0, 0)),          # W1_state  (VMEM-resident)
            pl.BlockSpec((O, 2 * H), lambda i: (0, 0)),          # W1_option (VMEM-resident)
            pl.BlockSpec((2, H, H), lambda i: (0, 0, 0)),        # W2 / W5 stacked
            pl.BlockSpec((2 * H, OUT), lambda i: (0, 0)),        # W3 / W6 block-diag, lane-padded
            pl.BlockSpec((1, bias.shape[1]), lambda i: (0, 0)),  # all biases packed, 128-aligned
        ],
        out_specs=pl.BlockSpec((tm, OUT), lambda i: (i, 0)),
        compiler_params=pltpu.CompilerParams(
            dimension_semantics=("parallel",),
            vmem_limit_bytes=32 * 1024 * 1024),      # headroom on v5e's 16 MiB default
    )(state, option, w1s, w1o, w25, w36, bias)

    q = q[:B]
    return q[:, :A], q[:, A:2 * A]


def init_params(key, state_dim, action_cardinality, option_dim):
    """Deterministic synthetic init mimicking nn.Linear's U(-1/sqrt(fan_in), ...).

    Weights stored as [in_features, out_features] (transpose of PyTorch), biases [1, out].
    """
    in_dim = state_dim + option_dim
    dims = [
        ("1", in_dim, HIDDEN), ("2", HIDDEN, HIDDEN), ("3", HIDDEN, action_cardinality),
        ("4", in_dim, HIDDEN), ("5", HIDDEN, HIDDEN), ("6", HIDDEN, action_cardinality),
    ]
    params = {}
    for name, fan_in, fan_out in dims:
        key, kw, kb = jax.random.split(key, 3)
        bound = 1.0 / jnp.sqrt(fan_in)
        params[f"w{name}"] = jax.random.uniform(
            kw, (fan_in, fan_out), jnp.float32, -bound, bound)
        params[f"b{name}"] = jax.random.uniform(
            kb, (1, fan_out), jnp.float32, -bound, bound)
    return params


def _reference_forward(state, option, params):
    """Plain-JAX f32 reference for correctness checking."""
    so = jnp.concatenate([state, option], axis=1)

    def head(a, b, c):
        h = jnp.maximum(so @ params[f"w{a}"] + params[f"b{a}"], 0.0)
        h = jnp.maximum(h @ params[f"w{b}"] + params[f"b{b}"], 0.0)
        return h @ params[f"w{c}"] + params[f"b{c}"]

    return head("1", "2", "3"), head("4", "5", "6")


if __name__ == "__main__":
    batch = 8
    state_dim = 24
    option_dim = 8
    action_cardinality = 7

    key = jax.random.PRNGKey(0)
    key, ks, ko, kp = jax.random.split(key, 4)
    state = jax.random.normal(ks, (batch, state_dim), jnp.float32)
    option = jax.random.normal(ko, (batch, option_dim), jnp.float32)

    params = init_params(kp, state_dim, action_cardinality, option_dim)
    packed = pack_params(params, state_dim)          # pack ONCE; reuse every call

    q1, q2 = critic_discrete_forward(state, option, packed, action_cardinality)
    q1 = jax.block_until_ready(q1)
    q2 = jax.block_until_ready(q2)

    r1, r2 = _reference_forward(state, option, params)
    assert q1.shape == (batch, action_cardinality)
    assert q2.shape == (batch, action_cardinality)
    # Layers 2-3 use bf16 weights/activations -> loosened tolerance vs. f32 ref.
    assert jnp.allclose(q1, r1, atol=5e-2, rtol=5e-2), float(jnp.max(jnp.abs(q1 - r1)))
    assert jnp.allclose(q2, r2, atol=5e-2, rtol=5e-2), float(jnp.max(jnp.abs(q2 - r2)))

    print("KERNEL_OK")
</pallas_src>

<mosaic_0001>
module attributes {stable_mosaic.version = 11 : i64} {
  func.func @_critic_kernel(%arg0: i32, %arg1: memref<8x24xf32, #tpu.memory_space<vmem>>, %arg2: memref<8x8xf32, #tpu.memory_space<vmem>>, %arg3: memref<24x512xf32, #tpu.memory_space<vmem>>, %arg4: memref<8x512xf32, #tpu.memory_space<vmem>>, %arg5: memref<2x256x256xbf16, #tpu.memory_space<vmem>>, %arg6: memref<512x128xbf16, #tpu.memory_space<vmem>>, %arg7: memref<1x1152xf32, #tpu.memory_space<vmem>>, %arg8: memref<8x128xf32, #tpu.memory_space<vmem>>) attributes {dimension_semantics = [#tpu.dimension_semantics<parallel>], iteration_bounds = array<i64: 1>, scalar_prefetch = 0 : i64, scratch_operands = 0 : i64, tpu.core_type = #tpu.core_type<tc>, window_params = [{transform_indices = @transform_0, window_bounds = array<i64: 8, 24>}, {transform_indices = @transform_1, window_bounds = array<i64: 8, 8>}, {pipeline_mode = #tpu.pipeline_mode<synchronous>, transform_indices = @transform_2, window_bounds = array<i64: 24, 512>}, {pipeline_mode = #tpu.pipeline_mode<synchronous>, transform_indices = @transform_3, window_bounds = array<i64: 8, 512>}, {pipeline_mode = #tpu.pipeline_mode<synchronous>, transform_indices = @transform_4, window_bounds = array<i64: 2, 256, 256>}, {pipeline_mode = #tpu.pipeline_mode<synchronous>, transform_indices = @transform_5, window_bounds = array<i64: 512, 128>}, {pipeline_mode = #tpu.pipeline_mode<synchronous>, transform_indices = @transform_6, window_bounds = array<i64: 1, 1152>}, {transform_indices = @transform_7, window_bounds = array<i64: 8, 128>}]} {
    %c0 = arith.constant 0 : index
    %c0_0 = arith.constant 0 : index
    %0 = vector.load %arg1[%c0, %c0_0] : memref<8x24xf32, #tpu.memory_space<vmem>>, vector<8x24xf32>
    %c0_1 = arith.constant 0 : index
    %c0_2 = arith.constant 0 : index
    %1 = vector.load %arg3[%c0_1, %c0_2] : memref<24x512xf32, #tpu.memory_space<vmem>>, vector<24x512xf32>
    %cst = arith.constant dense<0.000000e+00> : vector<8x512xf32>
    %2 = tpu.matmul %0, %1, %cst {dimension_numbers = #tpu.dot_dimension_numbers<[1], [0], [0], [1], [0, 0, 1, 1], [], []>} : vector<8x24xf32>, vector<24x512xf32>, vector<8x512xf32> -> vector<8x512xf32>
    %c0_3 = arith.constant 0 : index
    %c0_4 = arith.constant 0 : index
    %3 = vector.load %arg2[%c0_3, %c0_4] : memref<8x8xf32, #tpu.memory_space<vmem>>, vector<8x8xf32>
    %c0_5 = arith.constant 0 : index
    %c0_6 = arith.constant 0 : index
    %4 = vector.load %arg4[%c0_5, %c0_6] : memref<8x512xf32, #tpu.memory_space<vmem>>, vector<8x512xf32>
    %cst_7 = arith.constant dense<0.000000e+00> : vector<8x512xf32>
    %5 = tpu.matmul %3, %4, %cst_7 {dimension_numbers = #tpu.dot_dimension_numbers<[1], [0], [0], [1], [0, 0, 1, 1], [], []>} : vector<8x8xf32>, vector<8x512xf32>, vector<8x512xf32> -> vector<8x512xf32>
    %6 = arith.addf %2, %5 : vector<8x512xf32>
    %c0_8 = arith.constant 0 : index
    %c0_9 = arith.constant 0 : index
    %7 = vector.load %arg7[%c0_8, %c0_9] : memref<1x1152xf32, #tpu.memory_space<vmem>>, vector<1x512xf32>
    %8 = vector.broadcast %7 : vector<1x512xf32> to vector<8x512xf32>
    %9 = arith.addf %6, %8 : vector<8x512xf32>
    %cst_10 = arith.constant 0.000000e+00 : f32
    %10 = vector.broadcast %cst_10 : f32 to vector<8x512xf32>
    %11 = arith.maximumf %9, %10 : vector<8x512xf32>
    %12 = arith.truncf %11 : vector<8x512xf32> to vector<8x512xbf16>
    %13 = vector.extract_strided_slice %12 {offsets = [0, 0], sizes = [8, 256], strides = [1, 1]} : vector<8x512xbf16> to vector<8x256xbf16>
    %c0_11 = arith.constant 0 : index
    %c0_12 = arith.constant 0 : index
    %c0_13 = arith.constant 0 : index
    %14 = vector.load %arg5[%c0_11, %c0_12, %c0_13] : memref<2x256x256xbf16, #tpu.memory_space<vmem>>, vector<1x256x256xbf16>
    %15 = vector.shape_cast %14 : vector<1x256x256xbf16> to vector<256x256xbf16>
    %cst_14 = arith.constant dense<0.000000e+00> : vector<8x256xf32>
    %16 = tpu.matmul %13, %15, %cst_14 {dimension_numbers = #tpu.dot_dimension_numbers<[1], [0], [0], [1], [0, 0, 1, 1], [], []>} : vector<8x256xbf16>, vector<256x256xbf16>, vector<8x256xf32> -> vector<8x256xf32>
    %c0_15 = arith.constant 0 : index
    %c512 = arith.constant 512 : index
    %17 = vector.load %arg7[%c0_15, %c512] : memref<1x1152xf32, #tpu.memory_space<vmem>>, vector<1x256xf32>
    %18 = vector.broadcast %17 : vector<1x256xf32> to vector<8x256xf32>
    %19 = arith.addf %16, %18 : vector<8x256xf32>
    %20 = vector.extract_strided_slice %12 {offsets = [0, 256], sizes = [8, 256], strides = [1, 1]} : vector<8x512xbf16> to vector<8x256xbf16>
    %c1 = arith.constant 1 : index
    %c0_16 = arith.constant 0 : index
    %c0_17 = arith.constant 0 : index
    %21 = vector.load %arg5[%c1, %c0_16, %c0_17] : memref<2x256x256xbf16, #tpu.memory_space<vmem>>, vector<1x256x256xbf16>
    %22 = vector.shape_cast %21 : vector<1x256x256xbf16> to vector<256x256xbf16>
    %cst_18 = arith.constant dense<0.000000e+00> : vector<8x256xf32>
    %23 = tpu.matmul %20, %22, %cst_18 {dimension_numbers = #tpu.dot_dimension_numbers<[1], [0], [0], [1], [0, 0, 1, 1], [], []>} : vector<8x256xbf16>, vector<256x256xbf16>, vector<8x256xf32> -> vector<8x256xf32>
    %c0_19 = arith.constant 0 : index
    %c768 = arith.constant 768 : index
    %24 = vector.load %arg7[%c0_19, %c768] : memref<1x1152xf32, #tpu.memory_space<vmem>>, vector<1x256xf32>
    %25 = vector.broadcast %24 : vector<1x256xf32> to vector<8x256xf32>
    %26 = arith.addf %23, %25 : vector<8x256xf32>
    %cst_20 = arith.constant 0.000000e+00 : f32
    %27 = vector.broadcast %cst_20 : f32 to vector<8x256xf32>
    %28 = arith.maximumf %19, %27 : vector<8x256xf32>
    %29 = arith.truncf %28 : vector<8x256xf32> to vector<8x256xbf16>
    %c0_21 = arith.constant 0 : index
    %c0_22 = arith.constant 0 : index
    %30 = vector.load %arg6[%c0_21, %c0_22] : memref<512x128xbf16, #tpu.memory_space<vmem>>, vector<256x128xbf16>
    %cst_23 = arith.constant dense<0.000000e+00> : vector<8x128xf32>
    %31 = tpu.matmul %29, %30, %cst_23 {dimension_numbers = #tpu.dot_dimension_numbers<[1], [0], [0], [1], [0, 0, 1, 1], [], []>} : vector<8x256xbf16>, vector<256x128xbf16>, vector<8x128xf32> -> vector<8x128xf32>
    %cst_24 = arith.constant 0.000000e+00 : f32
    %32 = vector.broadcast %cst_24 : f32 to vector<8x256xf32>
    %33 = arith.maximumf %26, %32 : vector<8x256xf32>
    %34 = arith.truncf %33 : vector<8x256xf32> to vector<8x256xbf16>
    %c256 = arith.constant 256 : index
    %c0_25 = arith.constant 0 : index
    %35 = vector.load %arg6[%c256, %c0_25] : memref<512x128xbf16, #tpu.memory_space<vmem>>, vector<256x128xbf16>
    %cst_26 = arith.constant dense<0.000000e+00> : vector<8x128xf32>
    %36 = tpu.matmul %34, %35, %cst_26 {dimension_numbers = #tpu.dot_dimension_numbers<[1], [0], [0], [1], [0, 0, 1, 1], [], []>} : vector<8x256xbf16>, vector<256x128xbf16>, vector<8x128xf32> -> vector<8x128xf32>
    %37 = arith.addf %31, %36 : vector<8x128xf32>
    %c0_27 = arith.constant 0 : index
    %c1024 = arith.constant 1024 : index
    %38 = vector.load %arg7[%c0_27, %c1024] : memref<1x1152xf32, #tpu.memory_space<vmem>>, vector<1x128xf32>
    %39 = vector.broadcast %38 : vector<1x128xf32> to vector<8x128xf32>
    %40 = arith.addf %37, %39 : vector<8x128xf32>
    %c0_28 = arith.constant 0 : index
    %c0_29 = arith.constant 0 : index
    %41 = vector.load %arg8[%c0_28, %c0_29] : memref<8x128xf32, #tpu.memory_space<vmem>>, vector<8x128xf32>
    tpu.vector_store %arg8[%c0_28, %c0_29], %40 {strides = array<i32>} : memref<8x128xf32, #tpu.memory_space<vmem>>, vector<8x128xf32>,
    return
  }
  func.func @transform_0(%arg0: i32) -> (i32, i32) {
    %c0_i32 = arith.constant 0 : i32
    %c0_i32_0 = arith.constant 0 : i32
    return %arg0, %c0_i32 : i32, i32
  }
  func.func @transform_1(%arg0: i32) -> (i32, i32) {
    %c0_i32 = arith.constant 0 : i32
    %c0_i32_0 = arith.constant 0 : i32
    return %arg0, %c0_i32 : i32, i32
  }
  func.func @transform_2(%arg0: i32) -> (i32, i32) {
    %c0_i32 = arith.constant 0 : i32
    %c0_i32_0 = arith.constant 0 : i32
    %c0_i32_1 = arith.constant 0 : i32
    return %c0_i32, %c0_i32_0 : i32, i32
  }
  func.func @transform_3(%arg0: i32) -> (i32, i32) {
    %c0_i32 = arith.constant 0 : i32
    %c0_i32_0 = arith.constant 0 : i32
    %c0_i32_1 = arith.constant 0 : i32
    return %c0_i32, %c0_i32_0 : i32, i32
  }
  func.func @transform_4(%arg0: i32) -> (i32, i32, i32) {
    %c0_i32 = arith.constant 0 : i32
    %c0_i32_0 = arith.constant 0 : i32
    %c0_i32_1 = arith.constant 0 : i32
    %c0_i32_2 = arith.constant 0 : i32
    return %c0_i32, %c0_i32_0, %c0_i32_1 : i32, i32, i32
  }
  func.func @transform_5(%arg0: i32) -> (i32, i32) {
    %c0_i32 = arith.constant 0 : i32
    %c0_i32_0 = arith.constant 0 : i32
    %c0_i32_1 = arith.constant 0 : i32
    return %c0_i32, %c0_i32_0 : i32, i32
  }
  func.func @transform_6(%arg0: i32) -> (i32, i32) {
    %c0_i32 = arith.constant 0 : i32
    %c0_i32_0 = arith.constant 0 : i32
    %c0_i32_1 = arith.constant 0 : i32
    return %c0_i32, %c0_i32_0 : i32, i32
  }
  func.func @transform_7(%arg0: i32) -> (i32, i32) {
    %c0_i32 = arith.constant 0 : i32
    %c0_i32_0 = arith.constant 0 : i32
    return %arg0, %c0_i32 : i32, i32
  }
}

</mosaic_0001>

<llo_original>
// kernel: critic_discrete_forward.1
$region0: #{critic_discrete_forward.1}
  #allocation0 [shape = 'u32[]', space=smem, size = 0x4, offset = 0x4, fixed_abs, tag = 'smem constant byte address 0x4 - core index']
  #allocation1 [shape = 'u32[144,128]{1,0:T(1,128)}', space=vmem, size = 0x12000, scoped, tag = 'internal scratch']
  %s0 = inlined_call_operand.hbm [shape: f32[8,24], index: 0, kind: input, shape index: {}]
  %s1 = inlined_call_operand.hbm [shape: f32[8,8], index: 1, kind: input, shape index: {}]
  %s2 = inlined_call_operand.hbm [shape: f32[24,512], index: 2, kind: input, shape index: {}]
  %s3 = inlined_call_operand.hbm [shape: f32[8,512], index: 3, kind: input, shape index: {}]
  %s4 = inlined_call_operand.hbm [shape: bf16[2,256,256], index: 4, kind: input, shape index: {}]
  %s5 = inlined_call_operand.hbm [shape: bf16[512,128], index: 5, kind: input, shape index: {}]
  %s6 = inlined_call_operand.hbm [shape: f32[1,1152], index: 6, kind: input, shape index: {}]
  %s7 = inlined_call_operand.vmem [shape: f32[8,128], index: 7, kind: output, shape index: {}]
  %s8 = sld [smem:[#allocation0]]
  $region66: #{critic_discrete_forward.1} parent=0
    _
  %s10 = ssub.s32 1, %s8
  %s11 = scalar_select 0, %s10, %s8
  $region1: #{critic_discrete_forward.1} parent=0
    #allocation2 [shape = 'u8[4096]{0}', space=vmem, size = 0x1000, scoped, tag = 'input window, operand 0, single buffered']
    #allocation3 [shape = 's32[1]{0}', space=sflag, size = 0x4, scoped, tag = 'scoped memory for critic_discrete_forward.1']
    #allocation4 [shape = 'u8[4096]{0}', space=vmem, size = 0x1000, scoped, tag = 'input window, operand 1, single buffered']
    #allocation5 [shape = 's32[1]{0}', space=sflag, size = 0x4, scoped, tag = 'scoped memory for critic_discrete_forward.1']
    #allocation6 [shape = 'u8[49152]{0}', space=vmem, size = 0xc000, scoped, tag = 'input window, operand 2, single buffered']
    #allocation7 [shape = 'u8[16384]{0}', space=vmem, size = 0x4000, scoped, tag = 'input window, operand 3, single buffered']
    #allocation8 [shape = 's32[1]{0}', space=sflag, size = 0x4, scoped, tag = 'scoped memory for critic_discrete_forward.1']
    #allocation9 [shape = 'u8[262144]{0}', space=vmem, size = 0x40000, scoped, tag = 'input window, operand 4, single buffered']
    #allocation10 [shape = 'u8[131072]{0}', space=vmem, size = 0x20000, scoped, tag = 'input window, operand 5, single buffered']
    #allocation11 [shape = 's32[1]{0}', space=sflag, size = 0x4, scoped, tag = 'scoped memory for critic_discrete_forward.1']
    #allocation12 [shape = 'u8[4608]{0}', space=vmem, size = 0x1400, scoped, tag = 'input window, operand 6, single buffered']
    %12 = vsyncpa [#allocation3], 0
    %13 = vsyncpa [#allocation5], 0
    %14 = vsyncpa [#allocation8], 0
    %15 = vsyncpa [#allocation11], 0
    // Predicated region
    $region2: #{critic_discrete_forward.1} parent=1 // pred_check
      _
    $region3: #{critic_discrete_forward.1} parent=1 // pred_check_branch
      %17 = sbr.rel (0) target = $region5
    $region4: #{critic_discrete_forward.1} parent=1 // pred_region
      %s19 = ssub.s32 128, 128
      %20 = vsyncadd [#allocation3], %s19
      %s22 = sshll.u32 [#allocation2], 4
      %s23 = int_to_ptr.vmem [resolvable:$true] %s22
      %25 = dma.hbm_to_vmem [thread:$0]  %s0, 128, %s23, [#allocation3]
    $region5: #{critic_discrete_forward.1} parent=1 // pred_fallthru
      _
    // Predicated region
    $region6: #{critic_discrete_forward.1} parent=1 // pred_check
      _
    $region7: #{critic_discrete_forward.1} parent=1 // pred_check_branch
      %27 = sbr.rel (0) target = $region9
    $region8: #{critic_discrete_forward.1} parent=1 // pred_region
      %s29 = ssub.s32 128, 128
      %30 = vsyncadd [#allocation5], %s29
      %s32 = sshll.u32 [#allocation4], 4
      %s33 = int_to_ptr.vmem [resolvable:$true] %s32
      %35 = dma.hbm_to_vmem [thread:$0]  %s1, 128, %s33, [#allocation5]
    $region9: #{critic_discrete_forward.1} parent=1 // pred_fallthru
      _
    // Predicated region
    $region10: #{critic_discrete_forward.1} parent=1 // pred_check
      _
    $region11: #{critic_discrete_forward.1} parent=1 // pred_check_branch
      %37 = sbr.rel (0) target = $region13
    $region12: #{critic_discrete_forward.1} parent=1 // pred_region
      %s39 = ssub.s32 1536, 1536
      %40 = vsyncadd [#allocation5], %s39
      %s41 = sshll.u32 [#allocation6], 4
      %s42 = int_to_ptr.vmem [resolvable:$true] %s41
      %47 = dma.hbm_to_vmem [thread:$0]  %s2, 1536, %s42, [#allocation5], 512, 512, 32
    $region13: #{critic_discrete_forward.1} parent=1 // pred_fallthru
      _
    // Predicated region
    $region14: #{critic_discrete_forward.1} parent=1 // pred_check
      _
    $region15: #{critic_discrete_forward.1} parent=1 // pred_check_branch
      %49 = sbr.rel (0) target = $region17
    $region16: #{critic_discrete_forward.1} parent=1 // pred_region
      %s51 = ssub.s32 512, 512
      %52 = vsyncadd [#allocation8], %s51
      %s54 = sshll.u32 [#allocation7], 4
      %s55 = int_to_ptr.vmem [resolvable:$true] %s54
      %57 = dma.hbm_to_vmem [thread:$0]  %s3, 512, %s55, [#allocation8]
    $region17: #{critic_discrete_forward.1} parent=1 // pred_fallthru
      _
    // Predicated region
    $region18: #{critic_discrete_forward.1} parent=1 // pred_check
      _
    $region19: #{critic_discrete_forward.1} parent=1 // pred_check_branch
      %59 = sbr.rel (0) target = $region21
    $region20: #{critic_discrete_forward.1} parent=1 // pred_region
      %s61 = ssub.s32 8192, 8192
      %62 = vsyncadd [#allocation8], %s61
      %s63 = sshll.u32 [#allocation9], 4
      %s64 = int_to_ptr.vmem [resolvable:$true] %s63
      %69 = dma.hbm_to_vmem [thread:$0]  %s4, 8192, %s64, [#allocation8], 128, 128, 8
    $region21: #{critic_discrete_forward.1} parent=1 // pred_fallthru
      _
    // Predicated region
    $region22: #{critic_discrete_forward.1} parent=1 // pred_check
      _
    $region23: #{critic_discrete_forward.1} parent=1 // pred_check_branch
      %71 = sbr.rel (0) target = $region25
    $region24: #{critic_discrete_forward.1} parent=1 // pred_region
      %s73 = ssub.s32 4096, 4096
      %74 = vsyncadd [#allocation11], %s73
      %s75 = sshll.u32 [#allocation10], 4
      %s76 = int_to_ptr.vmem [resolvable:$true] %s75
      %81 = dma.hbm_to_vmem [thread:$0]  %s5, 4096, %s76, [#allocation11], 64, 64, 4
    $region25: #{critic_discrete_forward.1} parent=1 // pred_fallthru
      _
    // Predicated region
    $region26: #{critic_discrete_forward.1} parent=1 // pred_check
      _
    $region27: #{critic_discrete_forward.1} parent=1 // pred_check_branch
      %83 = sbr.rel (0) target = $region29
    $region28: #{critic_discrete_forward.1} parent=1 // pred_region
      %s85 = ssub.s32 144, 144
      %86 = vsyncadd [#allocation11], %s85
      %s88 = sshll.u32 [#allocation12], 4
      %s89 = int_to_ptr.vmem [resolvable:$true] %s88
      %91 = dma.hbm_to_vmem [thread:$0]  %s6, 144, %s89, [#allocation11]
    $region29: #{critic_discrete_forward.1} parent=1 // pred_fallthru
      _
    // Predicated region
    $region30: #{critic_discrete_forward.1} parent=1 // pred_check
      _
    $region31: #{critic_discrete_forward.1} parent=1 // pred_check_branch
      %93 = sbr.rel (0) target = $region33
    $region32: #{critic_discrete_forward.1} parent=1 // pred_region
      %94 = dma.done [#allocation3], 128
    $region33: #{critic_discrete_forward.1} parent=1 // pred_fallthru
      _
    // Predicated region
    $region34: #{critic_discrete_forward.1} parent=1 // pred_check
      _
    $region35: #{critic_discrete_forward.1} parent=1 // pred_check_branch
      %96 = sbr.rel (0) target = $region37
    $region36: #{critic_discrete_forward.1} parent=1 // pred_region
      %97 = dma.done [#allocation5], 128
    $region37: #{critic_discrete_forward.1} parent=1 // pred_fallthru
      _
    // Predicated region
    $region38: #{critic_discrete_forward.1} parent=1 // pred_check
      _
    $region39: #{critic_discrete_forward.1} parent=1 // pred_check_branch
      %99 = sbr.rel (0) target = $region41
    $region40: #{critic_discrete_forward.1} parent=1 // pred_region
      %100 = dma.done [#allocation5], 1536
    $region41: #{critic_discrete_forward.1} parent=1 // pred_fallthru
      _
    // Predicated region
    $region42: #{critic_discrete_forward.1} parent=1 // pred_check
      _
    $region43: #{critic_discrete_forward.1} parent=1 // pred_check_branch
      %102 = sbr.rel (0) target = $region45
    $region44: #{critic_discrete_forward.1} parent=1 // pred_region
      %103 = dma.done [#allocation8], 512
    $region45: #{critic_discrete_forward.1} parent=1 // pred_fallthru
      _
    // Predicated region
    $region46: #{critic_discrete_forward.1} parent=1 // pred_check
      _
    $region47: #{critic_discrete_forward.1} parent=1 // pred_check_branch
      %105 = sbr.rel (0) target = $region49
    $region48: #{critic_discrete_forward.1} parent=1 // pred_region
      %106 = dma.done [#allocation8], 8192
    $region49: #{critic_discrete_forward.1} parent=1 // pred_fallthru
      _
    // Predicated region
    $region50: #{critic_discrete_forward.1} parent=1 // pred_check
      _
    $region51: #{critic_discrete_forward.1} parent=1 // pred_check_branch
      %108 = sbr.rel (0) target = $region53
    $region52: #{critic_discrete_forward.1} parent=1 // pred_region
      %109 = dma.done [#allocation11], 4096
    $region53: #{critic_discrete_forward.1} parent=1 // pred_fallthru
      _
    // Predicated region
    $region54: #{critic_discrete_forward.1} parent=1 // pred_check
      _
    $region55: #{critic_discrete_forward.1} parent=1 // pred_check_branch
      %111 = sbr.rel (0) target = $region57
    $region56: #{critic_discrete_forward.1} parent=1 // pred_region
      %112 = dma.done [#allocation11], 144
    $region57: #{critic_discrete_forward.1} parent=1 // pred_fallthru
      _
    %v114 = vld [vmem:[#allocation2] sm:$0xff]
    %v115 = vld [vmem:[#allocation6] sm:$0xff]
    %v116 = vld [vmem:[#allocation6 + $0x8] sm:$0xff]
    %v117 = vld [vmem:[#allocation6 + $0x10] sm:$0xff]
    %v118 = vld [vmem:[#allocation6 + $0x18] sm:$0xff]
    %v119 = vld [vmem:[#allocation6 + $0x20] sm:$0xff]
    %v120 = vld [vmem:[#allocation6 + $0x28] sm:$0xff]
    %v121 = vld [vmem:[#allocation6 + $0x30] sm:$0xff]
    %v122 = vld [vmem:[#allocation6 + $0x38] sm:$0xff]
    %v123 = vld [vmem:[#allocation6 + $0x40] sm:$0xff]
    %v124 = vld [vmem:[#allocation6 + $0x48] sm:$0xff]
    %v125 = vld [vmem:[#allocation6 + $0x50] sm:$0xff]
    %v126 = vld [vmem:[#allocation6 + $0x58] sm:$0xff]
    %v127 = vld [vmem:[#allocation4] sm:$0xff]
    %v128 = vld [vmem:[#allocation7] sm:$0xff]
    %v129 = vld [vmem:[#allocation7 + $0x8] sm:$0xff]
    %v130 = vld [vmem:[#allocation7 + $0x10] sm:$0xff]
    %v131 = vld [vmem:[#allocation7 + $0x18] sm:$0xff]
    %vm132 = vcmask 64512
    %v134 = vsel %vm132, %v127, 0
    %136 = vmatprep.subr.mxu0 0.0
    %137 = vmatpush1.msra.mxu0 0.0
    %138 = vmatprep.subr.mxu0 0.0
    %139 = vmatpush1.msra.mxu0 0.0
    %140 = vmatprep.subr.mxu0 0.0
    %141 = vmatpush1.msra.mxu0 0.0
    %142 = vmatprep.subr.mxu0 0.0
    %143 = vmatpush1.msra.mxu0 0.0
    %144 = vmatprep.subr.mxu0 0.0
    %145 = vmatpush1.msra.mxu0 0.0
    %146 = vmatprep.subr.mxu0 0.0
    %147 = vmatpush1.msra.mxu0 0.0
    %148 = vmatprep.subr.mxu0 0.0
    %149 = vmatpush1.msra.mxu0 0.0
    %150 = vmatprep.subr.mxu0 0.0
    %151 = vmatpush1.msra.mxu0 0.0
    %152 = vmatprep.subr.mxu0 0.0
    %153 = vmatpush1.msra.mxu0 0.0
    %154 = vmatprep.subr.mxu0 0.0
    %155 = vmatpush1.msra.mxu0 0.0
    %156 = vmatprep.subr.mxu0 0.0
    %157 = vmatpush1.msra.mxu0 0.0
    %158 = vmatprep.subr.mxu0 0.0
    %159 = vmatpush1.msra.mxu0 0.0
    %160 = vmatprep.subr.mxu0 0.0
    %161 = vmatpush1.msra.mxu0 0.0
    %162 = vmatprep.subr.mxu0 0.0
    %163 = vmatpush1.msra.mxu0 0.0
    %164 = vmatprep.subr.mxu0 0.0
    %165 = vmatpush1.msra.mxu0 0.0
    %166 = vmatprep.subr.mxu0 %v129
    %167 = vmatpush1.msra.mxu0 %v128
    %168 = vmatprep.subr.mxu0 0.0
    %169 = vmatpush2.msra.mxu0 0.0
    %170 = vmatprep.subr.mxu0 0.0
    %171 = vmatpush2.msra.mxu0 0.0
    %172 = vmatprep.subr.mxu0 0.0
    %173 = vmatpush2.msra.mxu0 0.0
    %174 = vmatprep.subr.mxu0 0.0
    %175 = vmatpush2.msra.mxu0 0.0
    %176 = vmatprep.subr.mxu0 0.0
    %177 = vmatpush2.msra.mxu0 0.0
    %178 = vmatprep.subr.mxu0 0.0
    %179 = vmatpush2.msra.mxu0 0.0
    %180 = vmatprep.subr.mxu0 0.0
    %181 = vmatpush2.msra.mxu0 0.0
    %182 = vmatprep.subr.mxu0 0.0
    %183 = vmatpush2.msra.mxu0 0.0
    %184 = vmatprep.subr.mxu0 0.0
    %185 = vmatpush2.msra.mxu0 0.0
    %186 = vmatprep.subr.mxu0 0.0
    %187 = vmatpush2.msra.mxu0 0.0
    %188 = vmatprep.subr.mxu0 0.0
    %189 = vmatpush2.msra.mxu0 0.0
    %190 = vmatprep.subr.mxu0 0.0
    %191 = vmatpush2.msra.mxu0 0.0
    %192 = vmatprep.subr.mxu0 0.0
    %193 = vmatpush2.msra.mxu0 0.0
    %194 = vmatprep.subr.mxu0 0.0
    %195 = vmatpush2.msra.mxu0 0.0
    %196 = vmatprep.subr.mxu0 0.0
    %197 = vmatpush2.msra.mxu0 0.0
    %198 = vmatprep.subr.mxu0 0.0
    %199 = vmatpush2.msra.mxu0 0.0
    %200 = vmatprep.mubr.f32.mxu0 0.0
    %201 = vmatmul.mubr.f32.gmra.mxu0 %v134
    %v202 = vpop.f32.mrf.mxu0
    %v203 = vadd.f32 0.0, %v202
    %v204 = vpop.f32.mrf.mxu0
    %v205 = vadd.f32 0.0, %v204
    %206 = vdwg.mxu0
    %207 = vmatprep.subr.mxu0 0.0
    %208 = vmatpush1.msra.mxu0 0.0
    %209 = vmatprep.subr.mxu0 0.0
    %210 = vmatpush1.msra.mxu0 0.0
    %211 = vmatprep.subr.mxu0 0.0
    %212 = vmatpush1.msra.mxu0 0.0
    %213 = vmatprep.subr.mxu0 0.0
    %214 = vmatpush1.msra.mxu0 0.0
    %215 = vmatprep.subr.mxu0 0.0
    %216 = vmatpush1.msra.mxu0 0.0
    %217 = vmatprep.subr.mxu0 0.0
    %218 = vmatpush1.msra.mxu0 0.0
    %219 = vmatprep.subr.mxu0 0.0
    %220 = vmatpush1.msra.mxu0 0.0
    %221 = vmatprep.subr.mxu0 0.0
    %222 = vmatpush1.msra.mxu0 0.0
    %223 = vmatprep.subr.mxu0 0.0
    %224 = vmatpush1.msra.mxu0 0.0
    %225 = vmatprep.subr.mxu0 0.0
    %226 = vmatpush1.msra.mxu0 0.0
    %227 = vmatprep.subr.mxu0 0.0
    %228 = vmatpush1.msra.mxu0 0.0
    %229 = vmatprep.subr.mxu0 0.0
    %230 = vmatpush1.msra.mxu0 0.0
    %231 = vmatprep.subr.mxu0 0.0
    %232 = vmatpush1.msra.mxu0 0.0
    %233 = vmatprep.subr.mxu0 0.0
    %234 = vmatpush1.msra.mxu0 0.0
    %235 = vmatprep.subr.mxu0 0.0
    %236 = vmatpush1.msra.mxu0 0.0
    %237 = vmatprep.subr.mxu0 %v131
    %238 = vmatpush1.msra.mxu0 %v130
    %239 = vmatprep.subr.mxu0 0.0
    %240 = vmatpush2.msra.mxu0 0.0
    %241 = vmatprep.subr.mxu0 0.0
    %242 = vmatpush2.msra.mxu0 0.0
    %243 = vmatprep.subr.mxu0 0.0
    %244 = vmatpush2.msra.mxu0 0.0
    %245 = vmatprep.subr.mxu0 0.0
    %246 = vmatpush2.msra.mxu0 0.0
    %247 = vmatprep.subr.mxu0 0.0
    %248 = vmatpush2.msra.mxu0 0.0
    %249 = vmatprep.subr.mxu0 0.0
    %250 = vmatpush2.msra.mxu0 0.0
    %251 = vmatprep.subr.mxu0 0.0
    %252 = vmatpush2.msra.mxu0 0.0
    %253 = vmatprep.subr.mxu0 0.0
    %254 = vmatpush2.msra.mxu0 0.0
    %255 = vmatprep.subr.mxu0 0.0
    %256 = vmatpush2.msra.mxu0 0.0
    %257 = vmatprep.subr.mxu0 0.0
    %258 = vmatpush2.msra.mxu0 0.0
    %259 = vmatprep.subr.mxu0 0.0
    %260 = vmatpush2.msra.mxu0 0.0
    %261 = vmatprep.subr.mxu0 0.0
    %262 = vmatpush2.msra.mxu0 0.0
    %263 = vmatprep.subr.mxu0 0.0
    %264 = vmatpush2.msra.mxu0 0.0
    %265 = vmatprep.subr.mxu0 0.0
    %266 = vmatpush2.msra.mxu0 0.0
    %267 = vmatprep.subr.mxu0 0.0
    %268 = vmatpush2.msra.mxu0 0.0
    %269 = vmatprep.subr.mxu0 0.0
    %270 = vmatpush2.msra.mxu0 0.0
    %271 = vmatprep.mubr.f32.mxu0 0.0
    %272 = vmatmul.mubr.f32.gmra.mxu0 %v134
    %v273 = vpop.f32.mrf.mxu0
    %v274 = vadd.f32 0.0, %v273
    %v275 = vpop.f32.mrf.mxu0
    %v276 = vadd.f32 0.0, %v275
    %277 = vdwg.mxu0
    %vm278 = vcmask 195584
    %v280 = vsel %vm278, %v114, 0
    %282 = vmatprep.subr.mxu0 0.0
    %283 = vmatpush1.msra.mxu0 0.0
    %284 = vmatprep.subr.mxu0 0.0
    %285 = vmatpush1.msra.mxu0 0.0
    %286 = vmatprep.subr.mxu0 0.0
    %287 = vmatpush1.msra.mxu0 0.0
    %288 = vmatprep.subr.mxu0 0.0
    %289 = vmatpush1.msra.mxu0 0.0
    %290 = vmatprep.subr.mxu0 0.0
    %291 = vmatpush1.msra.mxu0 0.0
    %292 = vmatprep.subr.mxu0 0.0
    %293 = vmatpush1.msra.mxu0 0.0
    %294 = vmatprep.subr.mxu0 0.0
    %295 = vmatpush1.msra.mxu0 0.0
    %296 = vmatprep.subr.mxu0 0.0
    %297 = vmatpush1.msra.mxu0 0.0
    %298 = vmatprep.subr.mxu0 0.0
    %299 = vmatpush1.msra.mxu0 0.0
    %300 = vmatprep.subr.mxu0 0.0
    %301 = vmatpush1.msra.mxu0 0.0
    %302 = vmatprep.subr.mxu0 0.0
    %303 = vmatpush1.msra.mxu0 0.0
    %304 = vmatprep.subr.mxu0 0.0
    %305 = vmatpush1.msra.mxu0 0.0
    %306 = vmatprep.subr.mxu0 0.0
    %307 = vmatpush1.msra.mxu0 0.0
    %308 = vmatprep.subr.mxu0 %v124
    %309 = vmatpush1.msra.mxu0 %v123
    %310 = vmatprep.subr.mxu0 %v120
    %311 = vmatpush1.msra.mxu0 %v119
    %312 = vmatprep.subr.mxu0 %v116
    %313 = vmatpush1.msra.mxu0 %v115
    %314 = vmatprep.subr.mxu0 0.0
    %315 = vmatpush2.msra.mxu0 0.0
    %316 = vmatprep.subr.mxu0 0.0
    %317 = vmatpush2.msra.mxu0 0.0
    %318 = vmatprep.subr.mxu0 0.0
    %319 = vmatpush2.msra.mxu0 0.0
    %320 = vmatprep.subr.mxu0 0.0
    %321 = vmatpush2.msra.mxu0 0.0
    %322 = vmatprep.subr.mxu0 0.0
    %323 = vmatpush2.msra.mxu0 0.0
    %324 = vmatprep.subr.mxu0 0.0
    %325 = vmatpush2.msra.mxu0 0.0
    %326 = vmatprep.subr.mxu0 0.0
    %327 = vmatpush2.msra.mxu0 0.0
    %328 = vmatprep.subr.mxu0 0.0
    %329 = vmatpush2.msra.mxu0 0.0
    %330 = vmatprep.subr.mxu0 0.0
    %331 = vmatpush2.msra.mxu0 0.0
    %332 = vmatprep.subr.mxu0 0.0
    %333 = vmatpush2.msra.mxu0 0.0
    %334 = vmatprep.subr.mxu0 0.0
    %335 = vmatpush2.msra.mxu0 0.0
    %336 = vmatprep.subr.mxu0 0.0
    %337 = vmatpush2.msra.mxu0 0.0
    %338 = vmatprep.subr.mxu0 0.0
    %339 = vmatpush2.msra.mxu0 0.0
    %340 = vmatprep.subr.mxu0 0.0
    %341 = vmatpush2.msra.mxu0 0.0
    %342 = vmatprep.subr.mxu0 0.0
    %343 = vmatpush2.msra.mxu0 0.0
    %344 = vmatprep.subr.mxu0 0.0
    %345 = vmatpush2.msra.mxu0 0.0
    %346 = vmatprep.mubr.f32.mxu0 0.0
    %347 = vmatmul.mubr.f32.gmra.mxu0 %v280
    %v348 = vpop.f32.mrf.mxu0
    %v349 = vadd.f32 %v203, %v348
    %v350 = vpop.f32.mrf.mxu0
    %v351 = vadd.f32 %v205, %v350
    %352 = vdwg.mxu0
    %353 = vmatprep.subr.mxu0 0.0
    %354 = vmatpush1.msra.mxu0 0.0
    %355 = vmatprep.subr.mxu0 0.0
    %356 = vmatpush1.msra.mxu0 0.0
    %357 = vmatprep.subr.mxu0 0.0
    %358 = vmatpush1.msra.mxu0 0.0
    %359 = vmatprep.subr.mxu0 0.0
    %360 = vmatpush1.msra.mxu0 0.0
    %361 = vmatprep.subr.mxu0 0.0
    %362 = vmatpush1.msra.mxu0 0.0
    %363 = vmatprep.subr.mxu0 0.0
    %364 = vmatpush1.msra.mxu0 0.0
    %365 = vmatprep.subr.mxu0 0.0
    %366 = vmatpush1.msra.mxu0 0.0
    %367 = vmatprep.subr.mxu0 0.0
    %368 = vmatpush1.msra.mxu0 0.0
    %369 = vmatprep.subr.mxu0 0.0
    %370 = vmatpush1.msra.mxu0 0.0
    %371 = vmatprep.subr.mxu0 0.0
    %372 = vmatpush1.msra.mxu0 0.0
    %373 = vmatprep.subr.mxu0 0.0
    %374 = vmatpush1.msra.mxu0 0.0
    %375 = vmatprep.subr.mxu0 0.0
    %376 = vmatpush1.msra.mxu0 0.0
    %377 = vmatprep.subr.mxu0 0.0
    %378 = vmatpush1.msra.mxu0 0.0
    %379 = vmatprep.subr.mxu0 %v126
    %380 = vmatpush1.msra.mxu0 %v125
    %381 = vmatprep.subr.mxu0 %v122
    %382 = vmatpush1.msra.mxu0 %v121
    %383 = vmatprep.subr.mxu0 %v118
    %384 = vmatpush1.msra.mxu0 %v117
    %385 = vmatprep.subr.mxu0 0.0
    %386 = vmatpush2.msra.mxu0 0.0
    %387 = vmatprep.subr.mxu0 0.0
    %388 = vmatpush2.msra.mxu0 0.0
    %389 = vmatprep.subr.mxu0 0.0
    %390 = vmatpush2.msra.mxu0 0.0
    %391 = vmatprep.subr.mxu0 0.0
    %392 = vmatpush2.msra.mxu0 0.0
    %393 = vmatprep.subr.mxu0 0.0
    %394 = vmatpush2.msra.mxu0 0.0
    %395 = vmatprep.subr.mxu0 0.0
    %396 = vmatpush2.msra.mxu0 0.0
    %397 = vmatprep.subr.mxu0 0.0
    %398 = vmatpush2.msra.mxu0 0.0
    %399 = vmatprep.subr.mxu0 0.0
    %400 = vmatpush2.msra.mxu0 0.0
    %401 = vmatprep.subr.mxu0 0.0
    %402 = vmatpush2.msra.mxu0 0.0
    %403 = vmatprep.subr.mxu0 0.0
    %404 = vmatpush2.msra.mxu0 0.0
    %405 = vmatprep.subr.mxu0 0.0
    %406 = vmatpush2.msra.mxu0 0.0
    %407 = vmatprep.subr.mxu0 0.0
    %408 = vmatpush2.msra.mxu0 0.0
    %409 = vmatprep.subr.mxu0 0.0
    %410 = vmatpush2.msra.mxu0 0.0
    %411 = vmatprep.subr.mxu0 0.0
    %412 = vmatpush2.msra.mxu0 0.0
    %413 = vmatprep.subr.mxu0 0.0
    %414 = vmatpush2.msra.mxu0 0.0
    %415 = vmatprep.subr.mxu0 0.0
    %416 = vmatpush2.msra.mxu0 0.0
    %417 = vmatprep.mubr.f32.mxu0 0.0
    %418 = vmatmul.mubr.f32.gmra.mxu0 %v280
    %v419 = vpop.f32.mrf.mxu0
    %v420 = vadd.f32 %v274, %v419
    %v421 = vpop.f32.mrf.mxu0
    %v422 = vadd.f32 %v276, %v421
    %423 = vdwg.mxu0
    %v424 = vld [vmem:[#allocation12] sm:$0xf]
    %v426 = vlaneseq
    %v427 = vshrl.u32 %v426, 7
    %v428 = vsub.s32 0, %v427
    %v429 = vrot.slane %v424, %v428
    %v430 = vlaneseq
    %v431 = vshrl.u32 %v430, 7
    %v432 = vsub.s32 1, %v431
    %v433 = vrot.slane %v424, %v432
    %v434 = vlaneseq
    %v435 = vshrl.u32 %v434, 7
    %v436 = vsub.s32 2, %v435
    %v437 = vrot.slane %v424, %v436
    %v438 = vlaneseq
    %v439 = vshrl.u32 %v438, 7
    %v440 = vsub.s32 3, %v439
    %v441 = vrot.slane %v424, %v440
    %v446 = vadd.f32 %v349, %v429
    %v447 = vadd.f32 %v351, %v433
    %v448 = vadd.f32 %v420, %v437
    %v449 = vadd.f32 %v422, %v441
    %v450 = vmax.f32 %v446, 0.0
    %v451 = vmax.f32 %v447, 0.0
    %v452 = vmax.f32 %v448, 0.0
    %v453 = vmax.f32 %v449, 0.0
    %v454 = vpack.c.bf16 %v450, %v450
    %v455 = vpack.c.bf16 %v451, %v451
    %v456 = vpack.c.bf16 %v452, %v452
    %v457 = vpack.c.bf16 %v453, %v453
    %v458 = vld [vmem:[#allocation9] sm:$0xff]
    %v459 = vld [vmem:[#allocation9 + $0x8] sm:$0xff]
    %v460 = vld [vmem:[#allocation9 + $0x10] sm:$0xff]
    %v461 = vld [vmem:[#allocation9 + $0x18] sm:$0xff]
    %v462 = vld [vmem:[#allocation9 + $0x20] sm:$0xff]
    %v463 = vld [vmem:[#allocation9 + $0x28] sm:$0xff]
    %v464 = vld [vmem:[#allocation9 + $0x30] sm:$0xff]
    %v465 = vld [vmem:[#allocation9 + $0x38] sm:$0xff]
    %v466 = vld [vmem:[#allocation9 + $0x40] sm:$0xff]
    %v467 = vld [vmem:[#allocation9 + $0x48] sm:$0xff]
    %v468 = vld [vmem:[#allocation9 + $0x50] sm:$0xff]
    %v469 = vld [vmem:[#allocation9 + $0x58] sm:$0xff]
    %v470 = vld [vmem:[#allocation9 + $0x60] sm:$0xff]
    %v471 = vld [vmem:[#allocation9 + $0x68] sm:$0xff]
    %v472 = vld [vmem:[#allocation9 + $0x70] sm:$0xff]
    %v473 = vld [vmem:[#allocation9 + $0x78] sm:$0xff]
    %v474 = vld [vmem:[#allocation9 + $0x80] sm:$0xff]
    %v475 = vld [vmem:[#allocation9 + $0x88] sm:$0xff]
    %v476 = vld [vmem:[#allocation9 + $0x90] sm:$0xff]
    %v477 = vld [vmem:[#allocation9 + $0x98] sm:$0xff]
    %v478 = vld [vmem:[#allocation9 + $0xa0] sm:$0xff]
    %v479 = vld [vmem:[#allocation9 + $0xa8] sm:$0xff]
    %v480 = vld [vmem:[#allocation9 + $0xb0] sm:$0xff]
    %v481 = vld [vmem:[#allocation9 + $0xb8] sm:$0xff]
    %v482 = vld [vmem:[#allocation9 + $0xc0] sm:$0xff]
    %v483 = vld [vmem:[#allocation9 + $0xc8] sm:$0xff]
    %v484 = vld [vmem:[#allocation9 + $0xd0] sm:$0xff]
    %v485 = vld [vmem:[#allocation9 + $0xd8] sm:$0xff]
    %v486 = vld [vmem:[#allocation9 + $0xe0] sm:$0xff]
    %v487 = vld [vmem:[#allocation9 + $0xe8] sm:$0xff]
    %v488 = vld [vmem:[#allocation9 + $0xf0] sm:$0xff]
    %v489 = vld [vmem:[#allocation9 + $0xf8] sm:$0xff]
    %v490 = vld [vmem:[#allocation12 + $0x4] sm:$0x3]
    %v492 = vlaneseq
    %v493 = vshrl.u32 %v492, 7
    %v494 = vsub.s32 0, %v493
    %v495 = vrot.slane %v490, %v494
    %v496 = vlaneseq
    %v497 = vshrl.u32 %v496, 7
    %v498 = vsub.s32 1, %v497
    %v499 = vrot.slane %v490, %v498
    %v534 = vunpack.c.l.b16 %v458
    %v535 = vunpack.c.h.b16 %v458
    %v536 = vunpack.c.l.b16 %v459
    %v537 = vunpack.c.h.b16 %v459
    %v538 = vunpack.c.l.b16 %v460
    %v539 = vunpack.c.h.b16 %v460
    %v540 = vunpack.c.l.b16 %v461
    %v541 = vunpack.c.h.b16 %v461
    %v542 = vunpack.c.l.b16 %v462
    %v543 = vunpack.c.h.b16 %v462
    %v544 = vunpack.c.l.b16 %v463
    %v545 = vunpack.c.h.b16 %v463
    %v546 = vunpack.c.l.b16 %v464
    %v547 = vunpack.c.h.b16 %v464
    %v548 = vunpack.c.l.b16 %v465
    %v549 = vunpack.c.h.b16 %v465
    %v550 = vunpack.c.l.b16 %v466
    %v551 = vunpack.c.h.b16 %v466
    %v552 = vunpack.c.l.b16 %v467
    %v553 = vunpack.c.h.b16 %v467
    %v554 = vunpack.c.l.b16 %v468
    %v555 = vunpack.c.h.b16 %v468
    %v556 = vunpack.c.l.b16 %v469
    %v557 = vunpack.c.h.b16 %v469
    %v558 = vunpack.c.l.b16 %v470
    %v559 = vunpack.c.h.b16 %v470
    %v560 = vunpack.c.l.b16 %v471
    %v561 = vunpack.c.h.b16 %v471
    %v562 = vunpack.c.l.b16 %v472
    %v563 = vunpack.c.h.b16 %v472
    %v564 = vunpack.c.l.b16 %v473
    %v565 = vunpack.c.h.b16 %v473
    %v566 = vunpack.c.l.b16 %v474
    %v567 = vunpack.c.h.b16 %v474
    %v568 = vunpack.c.l.b16 %v475
    %v569 = vunpack.c.h.b16 %v475
    %v570 = vunpack.c.l.b16 %v476
    %v571 = vunpack.c.h.b16 %v476
    %v572 = vunpack.c.l.b16 %v477
    %v573 = vunpack.c.h.b16 %v477
    %v574 = vunpack.c.l.b16 %v478
    %v575 = vunpack.c.h.b16 %v478
    %v576 = vunpack.c.l.b16 %v479
    %v577 = vunpack.c.h.b16 %v479
    %v578 = vunpack.c.l.b16 %v480
    %v579 = vunpack.c.h.b16 %v480
    %v580 = vunpack.c.l.b16 %v481
    %v581 = vunpack.c.h.b16 %v481
    %v582 = vunpack.c.l.b16 %v482
    %v583 = vunpack.c.h.b16 %v482
    %v584 = vunpack.c.l.b16 %v483
    %v585 = vunpack.c.h.b16 %v483
    %v586 = vunpack.c.l.b16 %v484
    %v587 = vunpack.c.h.b16 %v484
    %v588 = vunpack.c.l.b16 %v485
    %v589 = vunpack.c.h.b16 %v485
    %v590 = vunpack.c.l.b16 %v486
    %v591 = vunpack.c.h.b16 %v486
    %v592 = vunpack.c.l.b16 %v487
    %v593 = vunpack.c.h.b16 %v487
    %v594 = vunpack.c.l.b16 %v488
    %v595 = vunpack.c.h.b16 %v488
    %v596 = vunpack.c.l.b16 %v489
    %v597 = vunpack.c.h.b16 %v489
    %v598 = vpack.c.b16 %v536, %v534
    %v599 = vpack.c.b16 %v537, %v535
    %v600 = vpack.c.b16 %v540, %v538
    %v601 = vpack.c.b16 %v541, %v539
    %v602 = vpack.c.b16 %v544, %v542
    %v603 = vpack.c.b16 %v545, %v543
    %v604 = vpack.c.b16 %v548, %v546
    %v605 = vpack.c.b16 %v549, %v547
    %v606 = vpack.c.b16 %v552, %v550
    %v607 = vpack.c.b16 %v553, %v551
    %v608 = vpack.c.b16 %v556, %v554
    %v609 = vpack.c.b16 %v557, %v555
    %v610 = vpack.c.b16 %v560, %v558
    %v611 = vpack.c.b16 %v561, %v559
    %v612 = vpack.c.b16 %v564, %v562
    %v613 = vpack.c.b16 %v565, %v563
    %v614 = vpack.c.b16 %v568, %v566
    %v615 = vpack.c.b16 %v569, %v567
    %v616 = vpack.c.b16 %v572, %v570
    %v617 = vpack.c.b16 %v573, %v571
    %v618 = vpack.c.b16 %v576, %v574
    %v619 = vpack.c.b16 %v577, %v575
    %v620 = vpack.c.b16 %v580, %v578
    %v621 = vpack.c.b16 %v581, %v579
    %v622 = vpack.c.b16 %v584, %v582
    %v623 = vpack.c.b16 %v585, %v583
    %v624 = vpack.c.b16 %v588, %v586
    %v625 = vpack.c.b16 %v589, %v587
    %v626 = vpack.c.b16 %v592, %v590
    %v627 = vpack.c.b16 %v593, %v591
    %v628 = vpack.c.b16 %v596, %v594
    %v629 = vpack.c.b16 %v597, %v595
    %662 = vmatprep.subr.bf16.mxu0 %v613
    %663 = vmatpush1.bf16.msra.mxu0 %v612
    %664 = vmatprep.subr.bf16.mxu0 %v611
    %665 = vmatpush1.bf16.msra.mxu0 %v610
    %666 = vmatprep.subr.bf16.mxu0 %v609
    %667 = vmatpush1.bf16.msra.mxu0 %v608
    %668 = vmatprep.subr.bf16.mxu0 %v607
    %669 = vmatpush1.bf16.msra.mxu0 %v606
    %670 = vmatprep.subr.bf16.mxu0 %v605
    %671 = vmatpush1.bf16.msra.mxu0 %v604
    %672 = vmatprep.subr.bf16.mxu0 %v603
    %673 = vmatpush1.bf16.msra.mxu0 %v602
    %674 = vmatprep.subr.bf16.mxu0 %v601
    %675 = vmatpush1.bf16.msra.mxu0 %v600
    %676 = vmatprep.subr.bf16.mxu0 %v599
    %677 = vmatpush1.bf16.msra.mxu0 %v598
    %678 = vmatprep.subr.bf16.mxu0 %v629
    %679 = vmatpush2.bf16.msra.mxu0 %v628
    %680 = vmatprep.subr.bf16.mxu0 %v627
    %681 = vmatpush2.bf16.msra.mxu0 %v626
    %682 = vmatprep.subr.bf16.mxu0 %v625
    %683 = vmatpush2.bf16.msra.mxu0 %v624
    %684 = vmatprep.subr.bf16.mxu0 %v623
    %685 = vmatpush2.bf16.msra.mxu0 %v622
    %686 = vmatprep.subr.bf16.mxu0 %v621
    %687 = vmatpush2.bf16.msra.mxu0 %v620
    %688 = vmatprep.subr.bf16.mxu0 %v619
    %689 = vmatpush2.bf16.msra.mxu0 %v618
    %690 = vmatprep.subr.bf16.mxu0 %v617
    %691 = vmatpush2.bf16.msra.mxu0 %v616
    %692 = vmatprep.subr.bf16.mxu0 %v615
    %693 = vmatpush2.bf16.msra.mxu0 %v614
    %694 = vmatprep.mubr.bf16.mxu0 %v455
    %695 = vmatmul.mubr.bf16.gmra.mxu0 %v454
    %v696 = vpop.f32.mrf.mxu0
    %v697 = vadd.f32 %v495, %v696
    %v698 = vpop.f32.mrf.mxu0
    %v699 = vadd.f32 %v499, %v698
    %v700 = vpop.f32.mrf.mxu0
    %v701 = vpop.f32.mrf.mxu0
    %702 = vdwg.mxu0
    %s703 = scalar_lea.vmem [#allocation9], 256
    %v704 = vld [vmem:[%s703] sm:$0xff]
    %v705 = vld [vmem:[%s703 + $0x8] sm:$0xff]
    %v706 = vld [vmem:[%s703 + $0x10] sm:$0xff]
    %v707 = vld [vmem:[%s703 + $0x18] sm:$0xff]
    %v708 = vld [vmem:[%s703 + $0x20] sm:$0xff]
    %v709 = vld [vmem:[%s703 + $0x28] sm:$0xff]
    %v710 = vld [vmem:[%s703 + $0x30] sm:$0xff]
    %v711 = vld [vmem:[%s703 + $0x38] sm:$0xff]
    %v712 = vld [vmem:[%s703 + $0x40] sm:$0xff]
    %v713 = vld [vmem:[%s703 + $0x48] sm:$0xff]
    %v714 = vld [vmem:[%s703 + $0x50] sm:$0xff]
    %v715 = vld [vmem:[%s703 + $0x58] sm:$0xff]
    %v716 = vld [vmem:[%s703 + $0x60] sm:$0xff]
    %v717 = vld [vmem:[%s703 + $0x68] sm:$0xff]
    %v718 = vld [vmem:[%s703 + $0x70] sm:$0xff]
    %v719 = vld [vmem:[%s703 + $0x78] sm:$0xff]
    %v720 = vld [vmem:[%s703 + $0x80] sm:$0xff]
    %v721 = vld [vmem:[%s703 + $0x88] sm:$0xff]
    %v722 = vld [vmem:[%s703 + $0x90] sm:$0xff]
    %v723 = vld [vmem:[%s703 + $0x98] sm:$0xff]
    %v724 = vld [vmem:[%s703 + $0xa0] sm:$0xff]
    %v725 = vld [vmem:[%s703 + $0xa8] sm:$0xff]
    %v726 = vld [vmem:[%s703 + $0xb0] sm:$0xff]
    %v727 = vld [vmem:[%s703 + $0xb8] sm:$0xff]
    %v728 = vld [vmem:[%s703 + $0xc0] sm:$0xff]
    %v729 = vld [vmem:[%s703 + $0xc8] sm:$0xff]
    %v730 = vld [vmem:[%s703 + $0xd0] sm:$0xff]
    %v731 = vld [vmem:[%s703 + $0xd8] sm:$0xff]
    %v732 = vld [vmem:[%s703 + $0xe0] sm:$0xff]
    %v733 = vld [vmem:[%s703 + $0xe8] sm:$0xff]
    %v734 = vld [vmem:[%s703 + $0xf0] sm:$0xff]
    %v735 = vld [vmem:[%s703 + $0xf8] sm:$0xff]
    %v736 = vld [vmem:[#allocation12 + $0x6] sm:$0x3]
    %v738 = vlaneseq
    %v739 = vshrl.u32 %v738, 7
    %v740 = vsub.s32 0, %v739
    %v741 = vrot.slane %v736, %v740
    %v742 = vlaneseq
    %v743 = vshrl.u32 %v742, 7
    %v744 = vsub.s32 1, %v743
    %v745 = vrot.slane %v736, %v744
    %v780 = vunpack.c.l.b16 %v704
    %v781 = vunpack.c.h.b16 %v704
    %v782 = vunpack.c.l.b16 %v705
    %v783 = vunpack.c.h.b16 %v705
    %v784 = vunpack.c.l.b16 %v706
    %v785 = vunpack.c.h.b16 %v706
    %v786 = vunpack.c.l.b16 %v707
    %v787 = vunpack.c.h.b16 %v707
    %v788 = vunpack.c.l.b16 %v708
    %v789 = vunpack.c.h.b16 %v708
    %v790 = vunpack.c.l.b16 %v709
    %v791 = vunpack.c.h.b16 %v709
    %v792 = vunpack.c.l.b16 %v710
    %v793 = vunpack.c.h.b16 %v710
    %v794 = vunpack.c.l.b16 %v711
    %v795 = vunpack.c.h.b16 %v711
    %v796 = vunpack.c.l.b16 %v712
    %v797 = vunpack.c.h.b16 %v712
    %v798 = vunpack.c.l.b16 %v713
    %v799 = vunpack.c.h.b16 %v713
    %v800 = vunpack.c.l.b16 %v714
    %v801 = vunpack.c.h.b16 %v714
    %v802 = vunpack.c.l.b16 %v715
    %v803 = vunpack.c.h.b16 %v715
    %v804 = vunpack.c.l.b16 %v716
    %v805 = vunpack.c.h.b16 %v716
    %v806 = vunpack.c.l.b16 %v717
    %v807 = vunpack.c.h.b16 %v717
    %v808 = vunpack.c.l.b16 %v718
    %v809 = vunpack.c.h.b16 %v718
    %v810 = vunpack.c.l.b16 %v719
    %v811 = vunpack.c.h.b16 %v719
    %v812 = vunpack.c.l.b16 %v720
    %v813 = vunpack.c.h.b16 %v720
    %v814 = vunpack.c.l.b16 %v721
    %v815 = vunpack.c.h.b16 %v721
    %v816 = vunpack.c.l.b16 %v722
    %v817 = vunpack.c.h.b16 %v722
    %v818 = vunpack.c.l.b16 %v723
    %v819 = vunpack.c.h.b16 %v723
    %v820 = vunpack.c.l.b16 %v724
    %v821 = vunpack.c.h.b16 %v724
    %v822 = vunpack.c.l.b16 %v725
    %v823 = vunpack.c.h.b16 %v725
    %v824 = vunpack.c.l.b16 %v726
    %v825 = vunpack.c.h.b16 %v726
    %v826 = vunpack.c.l.b16 %v727
    %v827 = vunpack.c.h.b16 %v727
    %v828 = vunpack.c.l.b16 %v728
    %v829 = vunpack.c.h.b16 %v728
    %v830 = vunpack.c.l.b16 %v729
    %v831 = vunpack.c.h.b16 %v729
    %v832 = vunpack.c.l.b16 %v730
    %v833 = vunpack.c.h.b16 %v730
    %v834 = vunpack.c.l.b16 %v731
    %v835 = vunpack.c.h.b16 %v731
    %v836 = vunpack.c.l.b16 %v732
    %v837 = vunpack.c.h.b16 %v732
    %v838 = vunpack.c.l.b16 %v733
    %v839 = vunpack.c.h.b16 %v733
    %v840 = vunpack.c.l.b16 %v734
    %v841 = vunpack.c.h.b16 %v734
    %v842 = vunpack.c.l.b16 %v735
    %v843 = vunpack.c.h.b16 %v735
    %v844 = vpack.c.b16 %v782, %v780
    %v845 = vpack.c.b16 %v783, %v781
    %v846 = vpack.c.b16 %v786, %v784
    %v847 = vpack.c.b16 %v787, %v785
    %v848 = vpack.c.b16 %v790, %v788
    %v849 = vpack.c.b16 %v791, %v789
    %v850 = vpack.c.b16 %v794, %v792
    %v851 = vpack.c.b16 %v795, %v793
    %v852 = vpack.c.b16 %v798, %v796
    %v853 = vpack.c.b16 %v799, %v797
    %v854 = vpack.c.b16 %v802, %v800
    %v855 = vpack.c.b16 %v803, %v801
    %v856 = vpack.c.b16 %v806, %v804
    %v857 = vpack.c.b16 %v807, %v805
    %v858 = vpack.c.b16 %v810, %v808
    %v859 = vpack.c.b16 %v811, %v809
    %v860 = vpack.c.b16 %v814, %v812
    %v861 = vpack.c.b16 %v815, %v813
    %v862 = vpack.c.b16 %v818, %v816
    %v863 = vpack.c.b16 %v819, %v817
    %v864 = vpack.c.b16 %v822, %v820
    %v865 = vpack.c.b16 %v823, %v821
    %v866 = vpack.c.b16 %v826, %v824
    %v867 = vpack.c.b16 %v827, %v825
    %v868 = vpack.c.b16 %v830, %v828
    %v869 = vpack.c.b16 %v831, %v829
    %v870 = vpack.c.b16 %v834, %v832
    %v871 = vpack.c.b16 %v835, %v833
    %v872 = vpack.c.b16 %v838, %v836
    %v873 = vpack.c.b16 %v839, %v837
    %v874 = vpack.c.b16 %v842, %v840
    %v875 = vpack.c.b16 %v843, %v841
    %908 = vmatprep.subr.bf16.mxu0 %v859
    %909 = vmatpush1.bf16.msra.mxu0 %v858
    %910 = vmatprep.subr.bf16.mxu0 %v857
    %911 = vmatpush1.bf16.msra.mxu0 %v856
    %912 = vmatprep.subr.bf16.mxu0 %v855
    %913 = vmatpush1.bf16.msra.mxu0 %v854
    %914 = vmatprep.subr.bf16.mxu0 %v853
    %915 = vmatpush1.bf16.msra.mxu0 %v852
    %916 = vmatprep.subr.bf16.mxu0 %v851
    %917 = vmatpush1.bf16.msra.mxu0 %v850
    %918 = vmatprep.subr.bf16.mxu0 %v849
    %919 = vmatpush1.bf16.msra.mxu0 %v848
    %920 = vmatprep.subr.bf16.mxu0 %v847
    %921 = vmatpush1.bf16.msra.mxu0 %v846
    %922 = vmatprep.subr.bf16.mxu0 %v845
    %923 = vmatpush1.bf16.msra.mxu0 %v844
    %924 = vmatprep.subr.bf16.mxu0 %v875
    %925 = vmatpush2.bf16.msra.mxu0 %v874
    %926 = vmatprep.subr.bf16.mxu0 %v873
    %927 = vmatpush2.bf16.msra.mxu0 %v872
    %928 = vmatprep.subr.bf16.mxu0 %v871
    %929 = vmatpush2.bf16.msra.mxu0 %v870
    %930 = vmatprep.subr.bf16.mxu0 %v869
    %931 = vmatpush2.bf16.msra.mxu0 %v868
    %932 = vmatprep.subr.bf16.mxu0 %v867
    %933 = vmatpush2.bf16.msra.mxu0 %v866
    %934 = vmatprep.subr.bf16.mxu0 %v865
    %935 = vmatpush2.bf16.msra.mxu0 %v864
    %936 = vmatprep.subr.bf16.mxu0 %v863
    %937 = vmatpush2.bf16.msra.mxu0 %v862
    %938 = vmatprep.subr.bf16.mxu0 %v861
    %939 = vmatpush2.bf16.msra.mxu0 %v860
    %940 = vmatprep.mubr.bf16.mxu0 %v457
    %941 = vmatmul.mubr.bf16.gmra.mxu0 %v456
    %v942 = vpop.f32.mrf.mxu0
    %v943 = vadd.f32 %v741, %v942
    %v944 = vpop.f32.mrf.mxu0
    %v945 = vadd.f32 %v745, %v944
    %v946 = vpop.f32.mrf.mxu0
    %v947 = vpop.f32.mrf.mxu0
    %948 = vdwg.mxu0
    %v949 = vmax.f32 %v697, 0.0
    %v950 = vmax.f32 %v699, 0.0
    %v951 = vpack.c.bf16 %v949, %v949
    %v952 = vpack.c.bf16 %v950, %v950
    %v953 = vld [vmem:[#allocation10] sm:$0xf]
    %v954 = vld [vmem:[#allocation10 + $0x4] sm:$0xf]
    %v955 = vld [vmem:[#allocation10 + $0x8] sm:$0xf]
    %v956 = vld [vmem:[#allocation10 + $0xc] sm:$0xf]
    %v957 = vld [vmem:[#allocation10 + $0x10] sm:$0xf]
    %v958 = vld [vmem:[#allocation10 + $0x14] sm:$0xf]
    %v959 = vld [vmem:[#allocation10 + $0x18] sm:$0xf]
    %v960 = vld [vmem:[#allocation10 + $0x1c] sm:$0xf]
    %v961 = vld [vmem:[#allocation10 + $0x20] sm:$0xf]
    %v962 = vld [vmem:[#allocation10 + $0x24] sm:$0xf]
    %v963 = vld [vmem:[#allocation10 + $0x28] sm:$0xf]
    %v964 = vld [vmem:[#allocation10 + $0x2c] sm:$0xf]
    %v965 = vld [vmem:[#allocation10 + $0x30] sm:$0xf]
    %v966 = vld [vmem:[#allocation10 + $0x34] sm:$0xf]
    %v967 = vld [vmem:[#allocation10 + $0x38] sm:$0xf]
    %v968 = vld [vmem:[#allocation10 + $0x3c] sm:$0xf]
    %v969 = vld [vmem:[#allocation10 + $0x40] sm:$0xf]
    %v970 = vld [vmem:[#allocation10 + $0x44] sm:$0xf]
    %v971 = vld [vmem:[#allocation10 + $0x48] sm:$0xf]
    %v972 = vld [vmem:[#allocation10 + $0x4c] sm:$0xf]
    %v973 = vld [vmem:[#allocation10 + $0x50] sm:$0xf]
    %v974 = vld [vmem:[#allocation10 + $0x54] sm:$0xf]
    %v975 = vld [vmem:[#allocation10 + $0x58] sm:$0xf]
    %v976 = vld [vmem:[#allocation10 + $0x5c] sm:$0xf]
    %v977 = vld [vmem:[#allocation10 + $0x60] sm:$0xf]
    %v978 = vld [vmem:[#allocation10 + $0x64] sm:$0xf]
    %v979 = vld [vmem:[#allocation10 + $0x68] sm:$0xf]
    %v980 = vld [vmem:[#allocation10 + $0x6c] sm:$0xf]
    %v981 = vld [vmem:[#allocation10 + $0x70] sm:$0xf]
    %v982 = vld [vmem:[#allocation10 + $0x74] sm:$0xf]
    %v983 = vld [vmem:[#allocation10 + $0x78] sm:$0xf]
    %v984 = vld [vmem:[#allocation10 + $0x7c] sm:$0xf]
    %v985 = vmax.f32 %v943, 0.0
    %v986 = vmax.f32 %v945, 0.0
    %v987 = vpack.c.bf16 %v985, %v985
    %v988 = vpack.c.bf16 %v986, %v986
    %v989 = vld [vmem:[#allocation10 + $0x80] sm:$0xf]
    %v990 = vld [vmem:[#allocation10 + $0x84] sm:$0xf]
    %v991 = vld [vmem:[#allocation10 + $0x88] sm:$0xf]
    %v992 = vld [vmem:[#allocation10 + $0x8c] sm:$0xf]
    %v993 = vld [vmem:[#allocation10 + $0x90] sm:$0xf]
    %v994 = vld [vmem:[#allocation10 + $0x94] sm:$0xf]
    %v995 = vld [vmem:[#allocation10 + $0x98] sm:$0xf]
    %v996 = vld [vmem:[#allocation10 + $0x9c] sm:$0xf]
    %v997 = vld [vmem:[#allocation10 + $0xa0] sm:$0xf]
    %v998 = vld [vmem:[#allocation10 + $0xa4] sm:$0xf]
    %v999 = vld [vmem:[#allocation10 + $0xa8] sm:$0xf]
    %v1000 = vld [vmem:[#allocation10 + $0xac] sm:$0xf]
    %v1001 = vld [vmem:[#allocation10 + $0xb0] sm:$0xf]
    %v1002 = vld [vmem:[#allocation10 + $0xb4] sm:$0xf]
    %v1003 = vld [vmem:[#allocation10 + $0xb8] sm:$0xf]
    %v1004 = vld [vmem:[#allocation10 + $0xbc] sm:$0xf]
    %v1005 = vld [vmem:[#allocation10 + $0xc0] sm:$0xf]
    %v1006 = vld [vmem:[#allocation10 + $0xc4] sm:$0xf]
    %v1007 = vld [vmem:[#allocation10 + $0xc8] sm:$0xf]
    %v1008 = vld [vmem:[#allocation10 + $0xcc] sm:$0xf]
    %v1009 = vld [vmem:[#allocation10 + $0xd0] sm:$0xf]
    %v1010 = vld [vmem:[#allocation10 + $0xd4] sm:$0xf]
    %v1011 = vld [vmem:[#allocation10 + $0xd8] sm:$0xf]
    %v1012 = vld [vmem:[#allocation10 + $0xdc] sm:$0xf]
    %v1013 = vld [vmem:[#allocation10 + $0xe0] sm:$0xf]
    %v1014 = vld [vmem:[#allocation10 + $0xe4] sm:$0xf]
    %v1015 = vld [vmem:[#allocation10 + $0xe8] sm:$0xf]
    %v1016 = vld [vmem:[#allocation10 + $0xec] sm:$0xf]
    %v1017 = vld [vmem:[#allocation10 + $0xf0] sm:$0xf]
    %v1018 = vld [vmem:[#allocation10 + $0xf4] sm:$0xf]
    %v1019 = vld [vmem:[#allocation10 + $0xf8] sm:$0xf]
    %v1020 = vld [vmem:[#allocation10 + $0xfc] sm:$0xf]
    %v1053 = vunpack.c.l.b16 %v989
    %v1054 = vunpack.c.l.b16 %v990
    %v1055 = vunpack.c.l.b16 %v991
    %v1056 = vunpack.c.l.b16 %v992
    %v1057 = vunpack.c.l.b16 %v993
    %v1058 = vunpack.c.l.b16 %v994
    %v1059 = vunpack.c.l.b16 %v995
    %v1060 = vunpack.c.l.b16 %v996
    %v1061 = vunpack.c.l.b16 %v997
    %v1062 = vunpack.c.l.b16 %v998
    %v1063 = vunpack.c.l.b16 %v999
    %v1064 = vunpack.c.l.b16 %v1000
    %v1065 = vunpack.c.l.b16 %v1001
    %v1066 = vunpack.c.l.b16 %v1002
    %v1067 = vunpack.c.l.b16 %v1003
    %v1068 = vunpack.c.l.b16 %v1004
    %v1069 = vunpack.c.l.b16 %v1005
    %v1070 = vunpack.c.l.b16 %v1006
    %v1071 = vunpack.c.l.b16 %v1007
    %v1072 = vunpack.c.l.b16 %v1008
    %v1073 = vunpack.c.l.b16 %v1009
    %v1074 = vunpack.c.l.b16 %v1010
    %v1075 = vunpack.c.l.b16 %v1011
    %v1076 = vunpack.c.l.b16 %v1012
    %v1077 = vunpack.c.l.b16 %v1013
    %v1078 = vunpack.c.l.b16 %v1014
    %v1079 = vunpack.c.l.b16 %v1015
    %v1080 = vunpack.c.l.b16 %v1016
    %v1081 = vunpack.c.l.b16 %v1017
    %v1082 = vunpack.c.l.b16 %v1018
    %v1083 = vunpack.c.l.b16 %v1019
    %v1084 = vunpack.c.l.b16 %v1020
    %v1085 = vpack.c.b16 %v1054, %v1053
    %v1086 = vpack.c.b16 %v1056, %v1055
    %v1087 = vpack.c.b16 %v1058, %v1057
    %v1088 = vpack.c.b16 %v1060, %v1059
    %v1089 = vpack.c.b16 %v1062, %v1061
    %v1090 = vpack.c.b16 %v1064, %v1063
    %v1091 = vpack.c.b16 %v1066, %v1065
    %v1092 = vpack.c.b16 %v1068, %v1067
    %v1093 = vpack.c.b16 %v1070, %v1069
    %v1094 = vpack.c.b16 %v1072, %v1071
    %v1095 = vpack.c.b16 %v1074, %v1073
    %v1096 = vpack.c.b16 %v1076, %v1075
    %v1097 = vpack.c.b16 %v1078, %v1077
    %v1098 = vpack.c.b16 %v1080, %v1079
    %v1099 = vpack.c.b16 %v1082, %v1081
    %v1100 = vpack.c.b16 %v1084, %v1083
    %1117 = vmatprep.subr.bf16.mxu0 0
    %1118 = vmatpush1.bf16.msra.mxu0 %v1092
    %1119 = vmatprep.subr.bf16.mxu0 0
    %1120 = vmatpush1.bf16.msra.mxu0 %v1091
    %1121 = vmatprep.subr.bf16.mxu0 0
    %1122 = vmatpush1.bf16.msra.mxu0 %v1090
    %1123 = vmatprep.subr.bf16.mxu0 0
    %1124 = vmatpush1.bf16.msra.mxu0 %v1089
    %1125 = vmatprep.subr.bf16.mxu0 0
    %1126 = vmatpush1.bf16.msra.mxu0 %v1088
    %1127 = vmatprep.subr.bf16.mxu0 0
    %1128 = vmatpush1.bf16.msra.mxu0 %v1087
    %1129 = vmatprep.subr.bf16.mxu0 0
    %1130 = vmatpush1.bf16.msra.mxu0 %v1086
    %1131 = vmatprep.subr.bf16.mxu0 0
    %1132 = vmatpush1.bf16.msra.mxu0 %v1085
    %1133 = vmatprep.subr.bf16.mxu0 0
    %1134 = vmatpush2.bf16.msra.mxu0 %v1100
    %1135 = vmatprep.subr.bf16.mxu0 0
    %1136 = vmatpush2.bf16.msra.mxu0 %v1099
    %1137 = vmatprep.subr.bf16.mxu0 0
    %1138 = vmatpush2.bf16.msra.mxu0 %v1098
    %1139 = vmatprep.subr.bf16.mxu0 0
    %1140 = vmatpush2.bf16.msra.mxu0 %v1097
    %1141 = vmatprep.subr.bf16.mxu0 0
    %1142 = vmatpush2.bf16.msra.mxu0 %v1096
    %1143 = vmatprep.subr.bf16.mxu0 0
    %1144 = vmatpush2.bf16.msra.mxu0 %v1095
    %1145 = vmatprep.subr.bf16.mxu0 0
    %1146 = vmatpush2.bf16.msra.mxu0 %v1094
    %1147 = vmatprep.subr.bf16.mxu0 0
    %1148 = vmatpush2.bf16.msra.mxu0 %v1093
    %1149 = vmatprep.mubr.bf16.mxu0 %v988
    %1150 = vmatmul.mubr.bf16.gmra.mxu0 %v987
    %v1151 = vpop.f32.mrf.mxu0
    %v1152 = vadd.f32 0.0, %v1151
    %v1153 = vpop.f32.mrf.mxu0
    %v1154 = vpop.f32.mrf.mxu0
    %v1155 = vpop.f32.mrf.mxu0
    %1156 = vdwg.mxu0
    %v1189 = vunpack.c.l.b16 %v953
    %v1190 = vunpack.c.l.b16 %v954
    %v1191 = vunpack.c.l.b16 %v955
    %v1192 = vunpack.c.l.b16 %v956
    %v1193 = vunpack.c.l.b16 %v957
    %v1194 = vunpack.c.l.b16 %v958
    %v1195 = vunpack.c.l.b16 %v959
    %v1196 = vunpack.c.l.b16 %v960
    %v1197 = vunpack.c.l.b16 %v961
    %v1198 = vunpack.c.l.b16 %v962
    %v1199 = vunpack.c.l.b16 %v963
    %v1200 = vunpack.c.l.b16 %v964
    %v1201 = vunpack.c.l.b16 %v965
    %v1202 = vunpack.c.l.b16 %v966
    %v1203 = vunpack.c.l.b16 %v967
    %v1204 = vunpack.c.l.b16 %v968
    %v1205 = vunpack.c.l.b16 %v969
    %v1206 = vunpack.c.l.b16 %v970
    %v1207 = vunpack.c.l.b16 %v971
    %v1208 = vunpack.c.l.b16 %v972
    %v1209 = vunpack.c.l.b16 %v973
    %v1210 = vunpack.c.l.b16 %v974
    %v1211 = vunpack.c.l.b16 %v975
    %v1212 = vunpack.c.l.b16 %v976
    %v1213 = vunpack.c.l.b16 %v977
    %v1214 = vunpack.c.l.b16 %v978
    %v1215 = vunpack.c.l.b16 %v979
    %v1216 = vunpack.c.l.b16 %v980
    %v1217 = vunpack.c.l.b16 %v981
    %v1218 = vunpack.c.l.b16 %v982
    %v1219 = vunpack.c.l.b16 %v983
    %v1220 = vunpack.c.l.b16 %v984
    %v1221 = vpack.c.b16 %v1190, %v1189
    %v1222 = vpack.c.b16 %v1192, %v1191
    %v1223 = vpack.c.b16 %v1194, %v1193
    %v1224 = vpack.c.b16 %v1196, %v1195
    %v1225 = vpack.c.b16 %v1198, %v1197
    %v1226 = vpack.c.b16 %v1200, %v1199
    %v1227 = vpack.c.b16 %v1202, %v1201
    %v1228 = vpack.c.b16 %v1204, %v1203
    %v1229 = vpack.c.b16 %v1206, %v1205
    %v1230 = vpack.c.b16 %v1208, %v1207
    %v1231 = vpack.c.b16 %v1210, %v1209
    %v1232 = vpack.c.b16 %v1212, %v1211
    %v1233 = vpack.c.b16 %v1214, %v1213
    %v1234 = vpack.c.b16 %v1216, %v1215
    %v1235 = vpack.c.b16 %v1218, %v1217
    %v1236 = vpack.c.b16 %v1220, %v1219
    %1253 = vmatprep.subr.bf16.mxu0 0
    %1254 = vmatpush1.bf16.msra.mxu0 %v1228
    %1255 = vmatprep.subr.bf16.mxu0 0
    %1256 = vmatpush1.bf16.msra.mxu0 %v1227
    %1257 = vmatprep.subr.bf16.mxu0 0
    %1258 = vmatpush1.bf16.msra.mxu0 %v1226
    %1259 = vmatprep.subr.bf16.mxu0 0
    %1260 = vmatpush1.bf16.msra.mxu0 %v1225
    %1261 = vmatprep.subr.bf16.mxu0 0
    %1262 = vmatpush1.bf16.msra.mxu0 %v1224
    %1263 = vmatprep.subr.bf16.mxu0 0
    %1264 = vmatpush1.bf16.msra.mxu0 %v1223
    %1265 = vmatprep.subr.bf16.mxu0 0
    %1266 = vmatpush1.bf16.msra.mxu0 %v1222
    %1267 = vmatprep.subr.bf16.mxu0 0
    %1268 = vmatpush1.bf16.msra.mxu0 %v1221
    %1269 = vmatprep.subr.bf16.mxu0 0
    %1270 = vmatpush2.bf16.msra.mxu0 %v1236
    %1271 = vmatprep.subr.bf16.mxu0 0
    %1272 = vmatpush2.bf16.msra.mxu0 %v1235
    %1273 = vmatprep.subr.bf16.mxu0 0
    %1274 = vmatpush2.bf16.msra.mxu0 %v1234
    %1275 = vmatprep.subr.bf16.mxu0 0
    %1276 = vmatpush2.bf16.msra.mxu0 %v1233
    %1277 = vmatprep.subr.bf16.mxu0 0
    %1278 = vmatpush2.bf16.msra.mxu0 %v1232
    %1279 = vmatprep.subr.bf16.mxu0 0
    %1280 = vmatpush2.bf16.msra.mxu0 %v1231
    %1281 = vmatprep.subr.bf16.mxu0 0
    %1282 = vmatpush2.bf16.msra.mxu0 %v1230
    %1283 = vmatprep.subr.bf16.mxu0 0
    %1284 = vmatpush2.bf16.msra.mxu0 %v1229
    %1285 = vmatprep.mubr.bf16.mxu0 %v952
    %1286 = vmatmul.mubr.bf16.gmra.mxu0 %v951
    %v1287 = vpop.f32.mrf.mxu0
    %v1288 = vadd.f32 %v1152, %v1287
    %v1289 = vpop.f32.mrf.mxu0
    %v1290 = vpop.f32.mrf.mxu0
    %v1291 = vpop.f32.mrf.mxu0
    %1292 = vdwg.mxu0
    %v1293 = vld [vmem:[#allocation12 + $0x8] sm:$0x1]
    %v1295 = vlaneseq
    %v1296 = vshrl.u32 %v1295, 7
    %v1297 = vsub.s32 0, %v1296
    %v1298 = vrot.slane %v1293, %v1297
    %v1300 = vadd.f32 %v1288, %v1298
    %1301 = vst [vmem:[%s7] sm:$0xff] %v1300
    // Predicated region
    $region58: #{critic_discrete_forward.1} parent=1 // pred_check
      _
    $region59: #{critic_discrete_forward.1} parent=1 // pred_check_branch
      %1303 = sbr.rel (0) target = $region61
    $region60: #{critic_discrete_forward.1} parent=1 // pred_region
      _
    $region61: #{critic_discrete_forward.1} parent=1 // pred_fallthru
      _
    // Predicated region
    $region62: #{critic_discrete_forward.1} parent=1 // pred_check
      _
    $region63: #{critic_discrete_forward.1} parent=1 // pred_check_branch
      %1305 = sbr.rel (0) target = $region65
    $region64: #{critic_discrete_forward.1} parent=1 // pred_region
      _
    $region65: #{critic_discrete_forward.1} parent=1 // pred_fallthru
      _
    %1306 = vsyncpa [#allocation3], 1
    %1307 = vsyncpa [#allocation5], 1
    %1308 = vsyncpa [#allocation8], 1
    %1309 = vsyncpa [#allocation11], 1

</llo_original>
